<compile_context>
chip_gen: v7x
topology: tpu7x:2x2x1
jax: 0.10.0
libtpu: 0.0.40
codegen_flags: <defaults>
</compile_context>

<pallas_src>
import jax
import jax.numpy as jnp
from jax.experimental import pallas as pl
from jax.experimental.pallas import tpu as pltpu


def _round_up(a, m):
    return (a + m - 1) // m * m


def _linear_single_kernel(x_ref, w_ref, b_ref, o_ref):
    # Whole (padded) problem resident in VMEM: bf16 MXU matmul, f32 accumulate,
    # f32 bias add, cast on store.
    acc = jnp.dot(x_ref[...], w_ref[...], preferred_element_type=jnp.float32)
    o_ref[...] = (acc + b_ref[...]).astype(o_ref.dtype)


def _linear_tiled_kernel(x_ref, w_ref, b_ref, o_ref, acc_ref):
    # Tiled matmul with resident f32 accumulator; K is the last grid axis.
    k = pl.program_id(2)

    @pl.when(k == 0)
    def _():
        acc_ref[...] = jnp.zeros_like(acc_ref)

    acc_ref[...] += jnp.dot(x_ref[...], w_ref[...],
                            preferred_element_type=jnp.float32)

    @pl.when(k == pl.num_programs(2) - 1)
    def _():
        o_ref[...] = (acc_ref[...] + b_ref[...]).astype(o_ref.dtype)


def pallas_linear(x, w_kn, b, *, tm=256, tn=256, tk=256):
    """y = x @ w_kn + b via Pallas (bf16 MXU inputs, f32 accumulation).

    x: [M, K] f32, w_kn: [K, N] f32 (PyTorch weight [N, K] pre-transposed),
    b: [N] f32  ->  y: [M, N] f32.
    """
    M, K = x.shape
    K2, N = w_kn.shape
    assert K == K2 and b.shape == (N,)
    out_dtype = x.dtype

    # Lane-dense padding: sublanes (8) on M, lanes (128) on K and N.
    tm = min(tm, _round_up(M, 8))
    tk = min(tk, _round_up(K, 128))
    tn = min(tn, _round_up(N, 128))
    Mp = _round_up(M, tm)
    Kp = _round_up(K, tk)
    Np = _round_up(N, tn)

    xb = jnp.pad(x.astype(jnp.bfloat16), ((0, Mp - M), (0, Kp - K)))
    wb = jnp.pad(w_kn.astype(jnp.bfloat16), ((0, Kp - K), (0, Np - N)))
    bb = jnp.pad(b.astype(jnp.float32).reshape(1, N), ((0, 0), (0, Np - N)))

    cost = pl.CostEstimate(
        flops=2 * Mp * Np * Kp,
        transcendentals=0,
        bytes_accessed=xb.size * 2 + wb.size * 2 + bb.size * 4 + Mp * Np * 4,
    )

    gm, gn, gk = Mp // tm, Np // tn, Kp // tk
    if gm * gn * gk == 1:
        # Overhead-bound small case: single VMEM-resident block, no grid.
        out_p = pl.pallas_call(
            _linear_single_kernel,
            out_shape=jax.ShapeDtypeStruct((Mp, Np), out_dtype),
            cost_estimate=cost,
        )(xb, wb, bb)
    else:
        out_p = pl.pallas_call(
            _linear_tiled_kernel,
            out_shape=jax.ShapeDtypeStruct((Mp, Np), out_dtype),
            grid=(gm, gn, gk),
            in_specs=[
                pl.BlockSpec((tm, tk), lambda i, j, k: (i, k)),
                pl.BlockSpec((tk, tn), lambda i, j, k: (k, j)),
                pl.BlockSpec((1, tn), lambda i, j, k: (0, j)),  # bias: j only
            ],
            out_specs=pl.BlockSpec((tm, tn), lambda i, j, k: (i, j)),
            scratch_shapes=[pltpu.VMEM((tm, tn), jnp.float32)],
            compiler_params=pltpu.CompilerParams(
                dimension_semantics=("parallel", "parallel", "arbitrary")),
            cost_estimate=cost,
        )(xb, wb, bb)

    if (Mp, Np) != (M, N):
        out_p = out_p[:M, :N]
    return out_p


class ApplyPallas:
    """JAX/Pallas equivalent of torch `Apply(module, dim)`.

    `module_fn` is applied to the `dim`-th element of the input sequence;
    every other element is returned unchanged.
    """

    def __init__(self, module_fn, dim=0):
        self.module_fn = module_fn
        self.dim = dim

    def __call__(self, x):
        xs = list(x)
        xs[self.dim] = self.module_fn(xs[self.dim])
        return xs


if __name__ == "__main__":
    key = jax.random.PRNGKey(0)
    k_x0, k_x1, k_w, k_b, k_x2, k_w2, k_b2 = jax.random.split(key, 7)

    # ---- Apply demo at small shapes (single-block, no-grid kernel path) ----
    M, K, N = 8, 32, 32            # seq=8, hidden=32
    x0 = jax.random.normal(k_x0, (M, K), dtype=jnp.float32)          # dim=0
    x1 = jax.random.normal(k_x1, (2, 4, 16, 16), dtype=jnp.float32)  # pass-thru

    # Deterministic Linear(32 -> 32) parameters (PyTorch weight is [N, K];
    # stored transposed as [K, N] for the kernel).
    w_nk = jax.random.normal(k_w, (N, K), dtype=jnp.float32) * 0.05
    b = jax.random.normal(k_b, (N,), dtype=jnp.float32) * 0.05
    w_kn = jnp.asarray(w_nk.T)

    apply_mod = ApplyPallas(lambda t: pallas_linear(t, w_kn, b), dim=0)
    out = apply_mod((x0, x1))
    out = [jax.block_until_ready(o) for o in out]

    # Reference: element 0 transformed (bf16-input / f32-acc reference, plus a
    # looser full-f32 sanity check), element 1 passed through untouched.
    ref0_bf16 = jnp.dot(x0.astype(jnp.bfloat16), w_kn.astype(jnp.bfloat16),
                        preferred_element_type=jnp.float32) + b
    assert out[0].shape == (M, N)
    assert jnp.allclose(out[0], ref0_bf16, atol=1e-2, rtol=1e-2)
    assert jnp.allclose(out[0], x0 @ w_kn + b, atol=5e-2, rtol=5e-2)
    assert out[1].shape == x1.shape
    assert jnp.array_equal(out[1], x1)

    # ---- Exercise the tiled (grid) path at a modestly larger shape ----
    M2, K2, N2 = 256, 256, 256
    x2 = jax.random.normal(k_x2, (M2, K2), dtype=jnp.float32)
    w2 = jax.random.normal(k_w2, (K2, N2), dtype=jnp.float32) * 0.05
    b2 = jax.random.normal(k_b2, (N2,), dtype=jnp.float32) * 0.05
    y2 = jax.block_until_ready(
        pallas_linear(x2, w2, b2, tm=128, tn=128, tk=128))
    ref2 = jnp.dot(x2.astype(jnp.bfloat16), w2.astype(jnp.bfloat16),
                   preferred_element_type=jnp.float32) + b2
    assert y2.shape == (M2, N2)
    assert jnp.allclose(y2, ref2, atol=1e-2, rtol=1e-2)

    print("KERNEL_OK")
</pallas_src>

<mosaic_0001>
module attributes {stable_mosaic.version = 11 : i64} {
  func.func @_linear_single_kernel(%arg0: memref<8x128xbf16, #tpu.memory_space<vmem>>, %arg1: memref<128x128xbf16, #tpu.memory_space<vmem>>, %arg2: memref<1x128xf32, #tpu.memory_space<vmem>>, %arg3: memref<8x128xf32, #tpu.memory_space<vmem>>) attributes {dimension_semantics = [], scalar_prefetch = 0 : i64, scratch_operands = 0 : i64, tpu.core_type = #tpu.core_type<tc>} {
    %c0 = arith.constant 0 : index
    %c0_0 = arith.constant 0 : index
    %0 = vector.load %arg0[%c0, %c0_0] : memref<8x128xbf16, #tpu.memory_space<vmem>>, vector<8x128xbf16>
    %c0_1 = arith.constant 0 : index
    %c0_2 = arith.constant 0 : index
    %1 = vector.load %arg1[%c0_1, %c0_2] : memref<128x128xbf16, #tpu.memory_space<vmem>>, vector<128x128xbf16>
    %cst = arith.constant dense<0.000000e+00> : vector<8x128xf32>
    %2 = tpu.matmul %0, %1, %cst {dimension_numbers = #tpu.dot_dimension_numbers<[1], [0], [0], [1], [0, 0, 1, 1], [], []>} : vector<8x128xbf16>, vector<128x128xbf16>, vector<8x128xf32> -> vector<8x128xf32>
    %c0_3 = arith.constant 0 : index
    %c0_4 = arith.constant 0 : index
    %3 = vector.load %arg2[%c0_3, %c0_4] : memref<1x128xf32, #tpu.memory_space<vmem>>, vector<1x128xf32>
    %4 = vector.broadcast %3 : vector<1x128xf32> to vector<8x128xf32>
    %5 = arith.addf %2, %4 : vector<8x128xf32>
    %c0_5 = arith.constant 0 : index
    %c0_6 = arith.constant 0 : index
    %6 = vector.load %arg3[%c0_5, %c0_6] : memref<8x128xf32, #tpu.memory_space<vmem>>, vector<8x128xf32>
    tpu.vector_store %arg3[%c0_5, %c0_6], %5 {strides = array<i32>} : memref<8x128xf32, #tpu.memory_space<vmem>>, vector<8x128xf32>,
    return
  }
}

</mosaic_0001>

<llo_original>
// kernel: tpu_custom_call.1
$region0: #{tpu_custom_call.1}
  #allocation0 [shape = 'u32[]', space=smem, size = 0x4, offset = 0x4, fixed_abs, tag = 'smem constant byte address 0x4 - core index']
  #allocation1 [shape = 'u32[144,128]{1,0:T(1,128)}', space=vmem, size = 0x12000, scoped, tag = 'internal scratch']
  %s0 = inlined_call_operand.hbm [shape: bf16[8,128], index: 0, kind: input, shape index: {}]
  %s1 = inlined_call_operand.hbm [shape: bf16[128,128], index: 1, kind: input, shape index: {}]
  %s2 = inlined_call_operand.vmem [shape: f32[1,128], index: 2, kind: input, shape index: {}]
  %s3 = inlined_call_operand.hbm [shape: f32[8,128], index: 3, kind: output, shape index: {}]
  %s4 = sld [smem:[#allocation0]]
  $region30: #{tpu_custom_call.1} parent=0
    _
  %s6 = ssub.s32 1, %s4
  %s7 = scalar_select 0, %s6, %s4
  $region1: #{tpu_custom_call.1} parent=0
    #allocation2 [shape = 'u8[2048]{0}', space=vmem, size = 0x800, scoped, tag = 'input window, operand 0, single buffered']
    #allocation3 [shape = 's32[1]{0}', space=sflag, size = 0x4, scoped, tag = 'scoped memory for tpu_custom_call.1']
    #allocation4 [shape = 's32[1]{0}', space=sflag, size = 0x4, scoped, tag = 'scoped memory for tpu_custom_call.1']
    #allocation5 [shape = 'u8[32768]{0}', space=vmem, size = 0x8000, scoped, tag = 'input window, operand 1, single buffered']
    #allocation6 [shape = 's32[1]{0}', space=sflag, size = 0x4, scoped, tag = 'scoped memory for tpu_custom_call.1']
    #allocation7 [shape = 'u8[4096]{0}', space=vmem, size = 0x1000, scoped, tag = 'output window, operand 0, single buffered']
    %8 = vsyncpa [#allocation3], 0
    %9 = vsyncpa [#allocation6], 0
    %10 = vsyncpa [#allocation4], 0
    // Predicated region
    $region2: #{tpu_custom_call.1} parent=1 // pred_check
      _
    $region3: #{tpu_custom_call.1} parent=1 // pred_check_branch
      %12 = sbr.rel (0) target = $region5
    $region4: #{tpu_custom_call.1} parent=1 // pred_region
      %s14 = ssub.s32 64, 64
      %15 = vsyncadd [#allocation3], %s14
      %s17 = sshll.u32 [#allocation2], 4
      %s18 = int_to_ptr.vmem [resolvable:$true] %s17
      %20 = dma.hbm_to_vmem [thread:$0]  %s0, 64, %s18, [#allocation3]
    $region5: #{tpu_custom_call.1} parent=1 // pred_fallthru
      _
    // Predicated region
    $region6: #{tpu_custom_call.1} parent=1 // pred_check
      _
    $region7: #{tpu_custom_call.1} parent=1 // pred_check_branch
      %22 = sbr.rel (0) target = $region9
    $region8: #{tpu_custom_call.1} parent=1 // pred_region
      %s24 = ssub.s32 1024, 1024
      %25 = vsyncadd [#allocation6], %s24
      %s26 = sshll.u32 [#allocation5], 4
      %s27 = int_to_ptr.vmem [resolvable:$true] %s26
      %32 = dma.hbm_to_vmem [thread:$0]  %s1, 1024, %s27, [#allocation6], 64, 64, 4
    $region9: #{tpu_custom_call.1} parent=1 // pred_fallthru
      _
    // Predicated region
    $region10: #{tpu_custom_call.1} parent=1 // pred_check
      _
    $region11: #{tpu_custom_call.1} parent=1 // pred_check_branch
      %34 = sbr.rel (0) target = $region13
    $region12: #{tpu_custom_call.1} parent=1 // pred_region
      _
    $region13: #{tpu_custom_call.1} parent=1 // pred_fallthru
      _
    // Predicated region
    $region14: #{tpu_custom_call.1} parent=1 // pred_check
      _
    $region15: #{tpu_custom_call.1} parent=1 // pred_check_branch
      %36 = sbr.rel (0) target = $region17
    $region16: #{tpu_custom_call.1} parent=1 // pred_region
      %37 = dma.done [#allocation3], 64
    $region17: #{tpu_custom_call.1} parent=1 // pred_fallthru
      _
    // Predicated region
    $region18: #{tpu_custom_call.1} parent=1 // pred_check
      _
    $region19: #{tpu_custom_call.1} parent=1 // pred_check_branch
      %39 = sbr.rel (0) target = $region21
    $region20: #{tpu_custom_call.1} parent=1 // pred_region
      %40 = dma.done [#allocation6], 1024
    $region21: #{tpu_custom_call.1} parent=1 // pred_fallthru
      _
    %v42 = vld [vmem:[#allocation2] sm:$0xf]
    %v43 = vld [vmem:[#allocation5] sm:$0xf]
    %v44 = vld [vmem:[#allocation5 + $0x4] sm:$0xf]
    %v45 = vld [vmem:[#allocation5 + $0x8] sm:$0xf]
    %v46 = vld [vmem:[#allocation5 + $0xc] sm:$0xf]
    %v47 = vld [vmem:[#allocation5 + $0x10] sm:$0xf]
    %v48 = vld [vmem:[#allocation5 + $0x14] sm:$0xf]
    %v49 = vld [vmem:[#allocation5 + $0x18] sm:$0xf]
    %v50 = vld [vmem:[#allocation5 + $0x1c] sm:$0xf]
    %v51 = vld [vmem:[#allocation5 + $0x20] sm:$0xf]
    %v52 = vld [vmem:[#allocation5 + $0x24] sm:$0xf]
    %v53 = vld [vmem:[#allocation5 + $0x28] sm:$0xf]
    %v54 = vld [vmem:[#allocation5 + $0x2c] sm:$0xf]
    %v55 = vld [vmem:[#allocation5 + $0x30] sm:$0xf]
    %v56 = vld [vmem:[#allocation5 + $0x34] sm:$0xf]
    %v57 = vld [vmem:[#allocation5 + $0x38] sm:$0xf]
    %v58 = vld [vmem:[#allocation5 + $0x3c] sm:$0xf]
    %v59 = vld [vmem:[%s2] sm:$0x1]
    %v61 = vlaneseq
    %v62 = vshrl.u32 %v61, 7
    %v63 = vsub.s32 0, %v62
    %v64 = vrot.slane %v59, %v63
    %v82 = vunpack.c.l.b16 %v43
    %v83 = vunpack.c.l.b16 %v44
    %v84 = vunpack.c.l.b16 %v45
    %v85 = vunpack.c.l.b16 %v46
    %v86 = vunpack.c.l.b16 %v47
    %v87 = vunpack.c.l.b16 %v48
    %v88 = vunpack.c.l.b16 %v49
    %v89 = vunpack.c.l.b16 %v50
    %v90 = vunpack.c.l.b16 %v51
    %v91 = vunpack.c.l.b16 %v52
    %v92 = vunpack.c.l.b16 %v53
    %v93 = vunpack.c.l.b16 %v54
    %v94 = vunpack.c.l.b16 %v55
    %v95 = vunpack.c.l.b16 %v56
    %v96 = vunpack.c.l.b16 %v57
    %v97 = vunpack.c.l.b16 %v58
    %v98 = vpack.c.b16 %v83, %v82
    %v99 = vpack.c.b16 %v85, %v84
    %v100 = vpack.c.b16 %v87, %v86
    %v101 = vpack.c.b16 %v89, %v88
    %v102 = vpack.c.b16 %v91, %v90
    %v103 = vpack.c.b16 %v93, %v92
    %v104 = vpack.c.b16 %v95, %v94
    %v105 = vpack.c.b16 %v97, %v96
    %114 = vmatprep.subr.bf16.mxu0 0
    %115 = vmatpush1.bf16.msra.mxu0 %v98
    %116 = vmatprep.subr.bf16.mxu0 0
    %117 = vmatpush1.bf16.msra.mxu0 %v99
    %118 = vmatprep.subr.bf16.mxu0 0
    %119 = vmatpush1.bf16.msra.mxu0 %v100
    %120 = vmatprep.subr.bf16.mxu0 0
    %121 = vmatpush1.bf16.msra.mxu0 %v101
    %122 = vmatprep.subr.bf16.mxu0 0
    %123 = vmatpush1.bf16.msra.mxu0 %v102
    %124 = vmatprep.subr.bf16.mxu0 0
    %125 = vmatpush1.bf16.msra.mxu0 %v103
    %126 = vmatprep.subr.bf16.mxu0 0
    %127 = vmatpush1.bf16.msra.mxu0 %v104
    %128 = vmatprep.subr.bf16.mxu0 0
    %129 = vmatpush1.bf16.msra.mxu0 %v105
    %130 = vmatprep.subr.bf16.mxu0 0
    %131 = vmatpush1.bf16.msra.mxu0 0
    %132 = vmatprep.subr.bf16.mxu0 0
    %133 = vmatpush1.bf16.msra.mxu0 0
    %134 = vmatprep.subr.bf16.mxu0 0
    %135 = vmatpush1.bf16.msra.mxu0 0
    %136 = vmatprep.subr.bf16.mxu0 0
    %137 = vmatpush1.bf16.msra.mxu0 0
    %138 = vmatprep.subr.bf16.mxu0 0
    %139 = vmatpush1.bf16.msra.mxu0 0
    %140 = vmatprep.subr.bf16.mxu0 0
    %141 = vmatpush1.bf16.msra.mxu0 0
    %142 = vmatprep.subr.bf16.mxu0 0
    %143 = vmatpush1.bf16.msra.mxu0 0
    %144 = vmatprep.subr.bf16.mxu0 0
    %145 = vmatpush1.bf16.msra.mxu0 0
    %146 = vmatprep.mubr.bf16.mxu0 0
    %147 = vmatmul.mubr.bf16.gmra.mrb[0].mxu0 %v42
    %v148 = vpop.f32.mrb[0].mxu0
    %v149 = vadd.f32 %v64, %v148
    %v150 = vpop.f32.mrb[0].mxu0
    %v151 = vpop.f32.mrb[0].mxu0
    %v152 = vpop.f32.mrb[0].mxu0
    %153 = vdwg.mxu0
    %154 = vst [vmem:[#allocation7] sm:$0xff] %v149
    // Predicated region
    $region22: #{tpu_custom_call.1} parent=1 // pred_check
      _
    $region23: #{tpu_custom_call.1} parent=1 // pred_check_branch
      %156 = sbr.rel (0) target = $region25
    $region24: #{tpu_custom_call.1} parent=1 // pred_region
      %s158 = ssub.s32 128, 128
      %159 = vsyncadd [#allocation4], %s158
      %s161 = sshll.u32 [#allocation7], 4
      %s162 = int_to_ptr.vmem [resolvable:$true] %s161
      %164 = dma.vmem_to_hbm [thread:$0]  %s162, 128, %s3, [#allocation4]
    $region25: #{tpu_custom_call.1} parent=1 // pred_fallthru
      _
    // Predicated region
    $region26: #{tpu_custom_call.1} parent=1 // pred_check
      _
    $region27: #{tpu_custom_call.1} parent=1 // pred_check_branch
      %166 = sbr.rel (0) target = $region29
    $region28: #{tpu_custom_call.1} parent=1 // pred_region
      %167 = dma.done [#allocation4], 128
    $region29: #{tpu_custom_call.1} parent=1 // pred_fallthru
      _
    %168 = vsyncpa [#allocation3], 1
    %169 = vsyncpa [#allocation6], 1
    %170 = vsyncpa [#allocation4], 1

</llo_original>
